<compile_context>
chip_gen: v7x
topology: tpu7x:2x2x1
jax: 0.10.0
libtpu: 0.0.40
codegen_flags: <defaults>
</compile_context>

<pallas_src>
import functools

import jax
import jax.numpy as jnp
from jax.experimental import pallas as pl
from jax.experimental.pallas import tpu as pltpu

_LANES = 128
_NUM_CORES = 2          # v7x has 2 TensorCores; harmless serial split on v5e/v6e.
_MAX_TILE_ROWS = 4096   # 4096 * 128 * 4 B = 2 MiB per f32 input block.


def _oze_sums_kernel(yt_ref, yp_ref, out_ref, *, f, spc, tile_rows,
                     rows_valid, lane_periodic):
    """Accumulate sum((yt-yp)^2) (plane 0) and the T-feature-only sum (plane 1).

    out_ref block: (1, 2, 8, 128) f32, resident across the inner grid axis.
    """
    c = pl.program_id(0)
    i = pl.program_id(1)

    @pl.when(i == 0)
    def _():
        out_ref[...] = jnp.zeros_like(out_ref)

    diff = yt_ref[...].astype(jnp.float32) - yp_ref[...].astype(jnp.float32)
    sq = diff * diff                                        # (tile_rows, 128)

    # Validity mask: zero out rows past the real data.  This covers both the
    # ragged final block and the clamped duplicate block the second core can
    # see when the block count is odd (its intended rows are all >= rows_valid).
    row = jax.lax.broadcasted_iota(jnp.int32, sq.shape, 0)
    global_row = (c * spc + i) * tile_rows + row
    sq = jnp.where(global_row < rows_valid, sq, 0.0)

    # (tile_rows, 128) -> (tile_rows//8, 8, 128); summing the leading axis is
    # pure vreg-wise VPU adds (no per-step cross-lane work, no SMEM RMW).
    partial_all = sq.reshape(tile_rows // 8, 8, _LANES).sum(axis=0)
    out_ref[0, 0] += partial_all

    if not lane_periodic:
        # General F (128 % F != 0): feature index of flat element p is p % F.
        lane = jax.lax.broadcasted_iota(jnp.int32, sq.shape, 1)
        flat = global_row * _LANES + lane
        sq_t = jnp.where((flat % f) == (f - 1), sq, 0.0)
        out_ref[0, 1] += sq_t.reshape(tile_rows // 8, 8, _LANES).sum(axis=0)

    if lane_periodic:
        # F divides 128: the T feature lives on a fixed lane pattern, so the
        # T-only sum is a one-off mask of the accumulated slab at the end.
        @pl.when(i == pl.num_programs(1) - 1)
        def _():
            lane8 = jax.lax.broadcasted_iota(jnp.int32, (8, _LANES), 1)
            out_ref[0, 1] = jnp.where((lane8 % f) == (f - 1),
                                      out_ref[0, 0], 0.0)


def oze_loss(y_true, y_pred, alpha: float = 0.3,
             max_tile_rows: int = _MAX_TILE_ROWS):
    assert y_true.shape == y_pred.shape, (y_true.shape, y_pred.shape)
    f = int(y_true.shape[-1])
    assert f >= 2, "OZELoss needs at least one Q feature and the T feature."

    n = int(y_true.size)              # total elements = M * F
    m = n // f                        # rows of the original (..., F) layout
    n_q = float(m * (f - 1))          # element count of y[..., :-1]
    n_t = float(m)                    # element count of y[..., -1]
    itemsize = jnp.dtype(y_true.dtype).itemsize

    # Lane-dense flatten: (..., F) -> (rows, 128).  Row-major reshape is free;
    # the only possible copy is a <128-element tail pad (both inputs padded
    # identically -> zero contribution to the sums).
    rows_valid = pl.cdiv(n, _LANES)
    yt = y_true.reshape(-1)
    yp = y_pred.reshape(-1)
    if rows_valid * _LANES != n:
        tail = rows_valid * _LANES - n
        yt = jnp.pad(yt, (0, tail))
        yp = jnp.pad(yp, (0, tail))
    yt = yt.reshape(rows_valid, _LANES)
    yp = yp.reshape(rows_valid, _LANES)

    # Tile sizing: big lane-dense blocks (~2 MiB f32) so HBM bandwidth — not
    # per-step pipeline overhead — is the limit; clamp for small inputs
    # (sublane count kept a multiple of 32 so packed dtypes stay legal).
    tile_rows = min(max_tile_rows, ((rows_valid + 31) // 32) * 32)
    nblk = pl.cdiv(rows_valid, tile_rows)
    spc = pl.cdiv(nblk, _NUM_CORES)   # row-blocks handled per core

    def in_map(c, i):
        # Clamp so the DMA never starts past the array; any duplicate block is
        # fully zeroed by the in-kernel validity mask.
        return (jnp.minimum(c * spc + i, nblk - 1), 0)

    kernel = functools.partial(
        _oze_sums_kernel,
        f=f, spc=spc, tile_rows=tile_rows, rows_valid=rows_valid,
        lane_periodic=(_LANES % f == 0),
    )

    sums = pl.pallas_call(
        kernel,
        out_shape=jax.ShapeDtypeStruct((_NUM_CORES, 2, 8, _LANES), jnp.float32),
        grid_spec=pltpu.PrefetchScalarGridSpec(
            num_scalar_prefetch=0,
            grid=(_NUM_CORES, spc),
            in_specs=[
                pl.BlockSpec((tile_rows, _LANES), in_map),
                pl.BlockSpec((tile_rows, _LANES), in_map),
            ],
            out_specs=pl.BlockSpec((1, 2, 8, _LANES),
                                   lambda c, i: (c, 0, 0, 0)),
        ),
        compiler_params=pltpu.CompilerParams(
            dimension_semantics=("parallel", "arbitrary"),
            vmem_limit_bytes=32 * 1024 * 1024,
        ),
        cost_estimate=pl.CostEstimate(
            flops=3 * n,
            transcendentals=0,
            bytes_accessed=2 * n * itemsize + _NUM_CORES * 2 * 8 * _LANES * 4,
        ),
    )(yt, yp)

    # Tiny scalar epilogue (2 * 2 * 8 * 128 floats): final reduce, means, logs.
    all_sum = jnp.sum(sums[:, 0])
    t_sum = jnp.sum(sums[:, 1])
    q_sum = all_sum - t_sum
    delta_q = q_sum / n_q             # MSE over the Q slice
    delta_t = t_sum / n_t             # MSE over the T slice
    return jnp.log1p(delta_t) + jnp.float32(alpha) * jnp.log1p(delta_q)


if __name__ == "__main__":
    key = jax.random.PRNGKey(0)
    k1, k2 = jax.random.split(key)
    B, S, F = 2, 8, 8  # (batch, seq, features); last feature = temperature T
    y_true = jax.random.normal(k1, (B, S, F), dtype=jnp.float32)
    y_pred = jax.random.normal(k2, (B, S, F), dtype=jnp.float32)

    loss = oze_loss(y_true, y_pred, alpha=0.3)
    jax.block_until_ready(loss)

    # Pure-JAX reference (same math as nn.MSELoss + logs).
    dq = jnp.mean((y_pred[..., :-1] - y_true[..., :-1]) ** 2)
    dt = jnp.mean((y_pred[..., -1] - y_true[..., -1]) ** 2)
    ref = jnp.log(1 + dt) + 0.3 * jnp.log(1 + dq)
    assert jnp.allclose(loss, ref, rtol=1e-5, atol=1e-6), (loss, ref)

    print("KERNEL_OK")
</pallas_src>

<mosaic_0001>
module attributes {stable_mosaic.version = 11 : i64} {
  func.func @_oze_sums_kernel(%arg0: i32, %arg1: i32, %arg2: memref<32x128xf32, #tpu.memory_space<vmem>>, %arg3: memref<32x128xf32, #tpu.memory_space<vmem>>, %arg4: memref<1x2x8x128xf32, #tpu.memory_space<vmem>>) attributes {dimension_semantics = [#tpu.dimension_semantics<parallel>, #tpu.dimension_semantics<arbitrary>], iteration_bounds = array<i64: 2, 1>, scalar_prefetch = 0 : i64, scratch_operands = 0 : i64, tpu.core_type = #tpu.core_type<tc>, window_params = [{transform_indices = @transform_0, window_bounds = array<i64: 32, 128>}, {transform_indices = @transform_1, window_bounds = array<i64: 32, 128>}, {transform_indices = @transform_2, window_bounds = array<i64: 1, 2, 8, 128>}]} {
    %c0_i32 = arith.constant 0 : i32
    %0 = arith.cmpi eq, %arg1, %c0_i32 : i32
    %1 = arith.extui %0 : i1 to i32
    %c0_i32_0 = arith.constant 0 : i32
    %2 = arith.cmpi ne, %1, %c0_i32_0 : i32
    scf.if %2 {
      %cst_16 = arith.constant 0.000000e+00 : f32
      %28 = vector.broadcast %cst_16 : f32 to vector<1x2x8x128xf32>
      %c0_17 = arith.constant 0 : index
      %c0_18 = arith.constant 0 : index
      %c0_19 = arith.constant 0 : index
      %c0_20 = arith.constant 0 : index
      %29 = vector.load %arg4[%c0_17, %c0_18, %c0_19, %c0_20] : memref<1x2x8x128xf32, #tpu.memory_space<vmem>>, vector<1x2x8x128xf32>
      tpu.vector_store %arg4[%c0_17, %c0_18, %c0_19, %c0_20], %28 {strides = array<i32>} : memref<1x2x8x128xf32, #tpu.memory_space<vmem>>, vector<1x2x8x128xf32>,
    } else {
    }
    %c0 = arith.constant 0 : index
    %c0_1 = arith.constant 0 : index
    %3 = vector.load %arg2[%c0, %c0_1] : memref<32x128xf32, #tpu.memory_space<vmem>>, vector<32x128xf32>
    %c0_2 = arith.constant 0 : index
    %c0_3 = arith.constant 0 : index
    %4 = vector.load %arg3[%c0_2, %c0_3] : memref<32x128xf32, #tpu.memory_space<vmem>>, vector<32x128xf32>
    %5 = arith.subf %3, %4 : vector<32x128xf32>
    %6 = arith.mulf %5, %5 : vector<32x128xf32>
    %7 = tpu.iota {dimensions = array<i32: 0>} : vector<32x128xi32>
    %c1_i32 = arith.constant 1 : i32
    %8 = arith.muli %arg0, %c1_i32 : i32
    %9 = arith.addi %8, %arg1 : i32
    %c32_i32 = arith.constant 32 : i32
    %10 = arith.muli %9, %c32_i32 : i32
    %11 = vector.broadcast %10 : i32 to vector<32x128xi32>
    %12 = arith.addi %11, %7 : vector<32x128xi32>
    %c1_i32_4 = arith.constant 1 : i32
    %13 = vector.broadcast %c1_i32_4 : i32 to vector<32x128xi32>
    %14 = arith.cmpi slt, %12, %13 : vector<32x128xi32>
    %cst = arith.constant 0.000000e+00 : f32
    %15 = vector.broadcast %cst : f32 to vector<32x128xf32>
    %16 = arith.select %14, %6, %15 : vector<32x128xi1>, vector<32x128xf32>
    %17 = vector.shape_cast %16 : vector<32x128xf32> to vector<4x8x128xf32>
    %cst_5 = arith.constant dense<0.000000e+00> : vector<8x128xf32>
    %18 = vector.multi_reduction <add>, %17, %cst_5 [0] : vector<4x8x128xf32> to vector<8x128xf32>
    %c0_6 = arith.constant 0 : index
    %c0_7 = arith.constant 0 : index
    %c0_8 = arith.constant 0 : index
    %c0_9 = arith.constant 0 : index
    %19 = vector.load %arg4[%c0_6, %c0_7, %c0_8, %c0_9] : memref<1x2x8x128xf32, #tpu.memory_space<vmem>>, vector<1x1x8x128xf32>
    %20 = vector.shape_cast %19 : vector<1x1x8x128xf32> to vector<8x128xf32>
    %21 = arith.addf %20, %18 : vector<8x128xf32>
    %c0_10 = arith.constant 0 : index
    %c0_11 = arith.constant 0 : index
    %c0_12 = arith.constant 0 : index
    %c0_13 = arith.constant 0 : index
    %22 = vector.load %arg4[%c0_10, %c0_11, %c0_12, %c0_13] : memref<1x2x8x128xf32, #tpu.memory_space<vmem>>, vector<1x1x8x128xf32>
    %23 = vector.shape_cast %22 : vector<1x1x8x128xf32> to vector<8x128xf32>
    %24 = vector.shape_cast %21 : vector<8x128xf32> to vector<1x1x8x128xf32>
    tpu.vector_store %arg4[%c0_10, %c0_11, %c0_12, %c0_13], %24 {strides = array<i32>} : memref<1x2x8x128xf32, #tpu.memory_space<vmem>>, vector<1x1x8x128xf32>,
    %c0_i32_14 = arith.constant 0 : i32
    %25 = arith.cmpi eq, %arg1, %c0_i32_14 : i32
    %26 = arith.extui %25 : i1 to i32
    %c0_i32_15 = arith.constant 0 : i32
    %27 = arith.cmpi ne, %26, %c0_i32_15 : i32
    scf.if %27 {
      %28 = tpu.iota {dimensions = array<i32: 1>} : vector<8x128xi32>
      %c8_i32 = arith.constant 8 : i32
      %c0_i32_16 = arith.constant 0 : i32
      %29 = arith.cmpi eq, %c8_i32, %c0_i32_16 : i32
      %c1_i32_17 = arith.constant 1 : i32
      %30 = arith.select %29, %c1_i32_17, %c8_i32 : i32
      %31 = vector.broadcast %30 : i32 to vector<8x128xi32>
      %32 = arith.remsi %28, %31 : vector<8x128xi32>
      %c0_i32_18 = arith.constant 0 : i32
      %33 = vector.broadcast %c0_i32_18 : i32 to vector<8x128xi32>
      %34 = arith.cmpi ne, %32, %33 : vector<8x128xi32>
      %c0_i32_19 = arith.constant 0 : i32
      %35 = vector.broadcast %c0_i32_19 : i32 to vector<8x128xi32>
      %36 = arith.cmpi slt, %32, %35 : vector<8x128xi32>
      %c0_i32_20 = arith.constant 0 : i32
      %37 = arith.cmpi slt, %30, %c0_i32_20 : i32
      %38 = vector.broadcast %37 : i1 to vector<8x128xi1>
      %39 = vector.broadcast %38 : vector<8x128xi1> to vector<8x128xi1>
      %40 = arith.xori %36, %39 : vector<8x128xi1>
      %41 = arith.andi %40, %34 : vector<8x128xi1>
      %42 = vector.broadcast %30 : i32 to vector<8x128xi32>
      %43 = arith.addi %32, %42 : vector<8x128xi32>
      %44 = arith.select %41, %43, %32 : vector<8x128xi1>, vector<8x128xi32>
      %c7_i32 = arith.constant 7 : i32
      %45 = vector.broadcast %c7_i32 : i32 to vector<8x128xi32>
      %46 = arith.cmpi eq, %44, %45 : vector<8x128xi32>
      %c0_21 = arith.constant 0 : index
      %c0_22 = arith.constant 0 : index
      %c0_23 = arith.constant 0 : index
      %c0_24 = arith.constant 0 : index
      %47 = vector.load %arg4[%c0_21, %c0_22, %c0_23, %c0_24] : memref<1x2x8x128xf32, #tpu.memory_space<vmem>>, vector<1x1x8x128xf32>
      %48 = vector.shape_cast %47 : vector<1x1x8x128xf32> to vector<8x128xf32>
      %cst_25 = arith.constant 0.000000e+00 : f32
      %49 = vector.broadcast %cst_25 : f32 to vector<8x128xf32>
      %50 = arith.select %46, %48, %49 : vector<8x128xi1>, vector<8x128xf32>
      %c0_26 = arith.constant 0 : index
      %c1 = arith.constant 1 : index
      %c0_27 = arith.constant 0 : index
      %c0_28 = arith.constant 0 : index
      %51 = vector.load %arg4[%c0_26, %c1, %c0_27, %c0_28] : memref<1x2x8x128xf32, #tpu.memory_space<vmem>>, vector<1x1x8x128xf32>
      %52 = vector.shape_cast %51 : vector<1x1x8x128xf32> to vector<8x128xf32>
      %53 = vector.shape_cast %50 : vector<8x128xf32> to vector<1x1x8x128xf32>
      tpu.vector_store %arg4[%c0_26, %c1, %c0_27, %c0_28], %53 {strides = array<i32>} : memref<1x2x8x128xf32, #tpu.memory_space<vmem>>, vector<1x1x8x128xf32>,
    } else {
    }
    return
  }
  func.func @transform_0(%arg0: i32, %arg1: i32) -> (i32, i32) {
    %c1_i32 = arith.constant 1 : i32
    %0 = arith.muli %arg0, %c1_i32 : i32
    %1 = arith.addi %0, %arg1 : i32
    %c0_i32 = arith.constant 0 : i32
    %2 = arith.minsi %1, %c0_i32 : i32
    %c0_i32_0 = arith.constant 0 : i32
    %c0_i32_1 = arith.constant 0 : i32
    return %2, %c0_i32_0 : i32, i32
  }
  func.func @transform_1(%arg0: i32, %arg1: i32) -> (i32, i32) {
    %c1_i32 = arith.constant 1 : i32
    %0 = arith.muli %arg0, %c1_i32 : i32
    %1 = arith.addi %0, %arg1 : i32
    %c0_i32 = arith.constant 0 : i32
    %2 = arith.minsi %1, %c0_i32 : i32
    %c0_i32_0 = arith.constant 0 : i32
    %c0_i32_1 = arith.constant 0 : i32
    return %2, %c0_i32_0 : i32, i32
  }
  func.func @transform_2(%arg0: i32, %arg1: i32) -> (i32, i32, i32, i32) {
    %c0_i32 = arith.constant 0 : i32
    %c0_i32_0 = arith.constant 0 : i32
    %c0_i32_1 = arith.constant 0 : i32
    %c0_i32_2 = arith.constant 0 : i32
    return %arg0, %c0_i32, %c0_i32_0, %c0_i32_1 : i32, i32, i32, i32
  }
}

</mosaic_0001>

<llo_original>
// kernel: tpu_custom_call.1
$region0: #{tpu_custom_call.1}
  #allocation0 [shape = 'u32[]', space=smem, size = 0x4, offset = 0x4, fixed_abs, tag = 'smem constant byte address 0x4 - core index']
  #allocation1 [shape = 'u32[144,128]{1,0:T(1,128)}', space=vmem, size = 0x12000, scoped, tag = 'internal scratch']
  %s0 = inlined_call_operand.hbm [shape: f32[1,128], index: 0, kind: input, shape index: {}]
  %s1 = inlined_call_operand.vmem [shape: f32[1,128], index: 1, kind: input, shape index: {}]
  %s2 = inlined_call_operand.hbm [shape: f32[2,2,8,128], index: 2, kind: output, shape index: {}]
  %s3 = sld [smem:[#allocation0]]
  $region53: #{tpu_custom_call.1} parent=0
    _
  %s5 = ssub.s32 1, %s3
  %s6 = scalar_select 0, %s5, %s3
  $region1: #{tpu_custom_call.1} parent=0
    #allocation2 [shape = 'u8[32768]{0}', space=vmem, size = 0x8000, scoped, tag = 'input window, operand 0']
    #allocation3 [shape = 's32[2]{0}', space=sflag, size = 0x8, scoped, tag = 'scoped memory for tpu_custom_call.1']
    #allocation4 [shape = 's32[2]{0}', space=sflag, size = 0x8, scoped, tag = 'scoped memory for tpu_custom_call.1']
    #allocation5 [shape = 'u8[16384]{0}', space=vmem, size = 0x4000, scoped, tag = 'output window, operand 0']
    %7 = vsyncpa [#allocation3], 0
    %s8 = scalar_lea.sflag [#allocation3], 1
    %9 = vsyncpa %s8, 0
    %10 = vsyncpa [#allocation4], 0
    %s11 = scalar_lea.sflag [#allocation4], 1
    %12 = vsyncpa %s11, 0
    loop: start=0, step=1, limit=4
    $region2: #{tpu_custom_call.1} parent=1 // loop_pre_header
      _
    $region3: #{tpu_custom_call.1} parent=1 // loop_header
      %s14 = sphi 0, %s18
      %p15 = scmp.ge.s32.totalorder %s14, 4
      %s21 = sphi 0, %s33
      %s22 = sphi 0, %s29
      %s23 = sphi 0, %s21
      %s24 = sphi 0, %s22
      %s25 = sphi 0, %s23
      %s26 = sphi 0, %s24
      %s42 = sphi 0, %s44
      %s45 = sphi 0, %s42
      %s46 = sphi 0, %s45
      %s62 = sphi 0, %s46
      %s74 = sphi 0, %s76
      %s77 = sphi 0, %s74
      %s78 = sphi 0, %s77
      %s94 = sphi 0, %s78
      %s100 = sphi 0, %s102
      %s103 = sphi 0, %s100
      %s104 = sphi 0, %s103
      %s120 = sphi 0, %s104
    $region4: #{tpu_custom_call.1} parent=1 // loop_header_branch
      %17 = sbr.rel (%p15) target = $region8
    $region5: #{tpu_custom_call.1} parent=1 // loop_body
      %s19 = ssub.s32 %s14, 1
      %s20 = ssub.s32 %s14, 2
      %s27 = sadd.s32 1, %s22
      %p28 = scmp.ge.s32.totalorder %s27, 1
      %s29 = scalar_select %p28, 0, %s27
      %s30 = sadd.s32 1, %s21
      %s31 = scalar_select %p28, %s30, %s21
      %p32 = scmp.ge.s32.totalorder %s31, 2
      %s33 = scalar_select %p32, 0, %s31
      %s34 = sadd.s32 %s21, %s22
      %p35 = scmp.lt.s32.totalorder %s34, 0
      %s36 = scalar_select %p35, %s34, 0
      %s37 = sadd.s32 %s33, %s29
      %p38 = scmp.lt.s32.totalorder %s37, 0
      %s39 = scalar_select %p38, %s37, 0
      %s40 = ssub.s32 %s36, %s39
      %p41 = scmp.eq.s32.totalorder %s40, 0
      %s43 = sadd.s32 %s42, 1
      %s44 = scalar_select %p41, %s42, %s43
      %p47 = pneg %p41
      %p48 = scmp.eq.s32.totalorder %s14, 1
      %p49 = por %p47, %p48
      %p50 = scmp.ne.s32.totalorder %s42, %s45
      %p51 = scmp.eq.s32.totalorder %s14, 0
      %p52 = por %p50, %p51
      %p53 = scmp.ne.s32.totalorder %s42, %s45
      %p54 = scmp.eq.s32.totalorder %s19, 1
      %p55 = por %p53, %p54
      %p56 = scmp.ne.s32.totalorder %s45, %s46
      %p57 = scmp.eq.s32.totalorder %s19, 0
      %p58 = por %p56, %p57
      %p59 = scmp.ne.s32.totalorder %s45, %s46
      %p60 = scmp.eq.s32.totalorder %s20, 1
      %p61 = por %p59, %p60
      %p63 = scmp.ne.s32.totalorder %s46, %s62
      %p64 = scmp.eq.s32.totalorder %s20, 0
      %p65 = por %p63, %p64
      %s66 = sadd.s32 %s21, %s22
      %p67 = scmp.lt.s32.totalorder %s66, 0
      %s68 = scalar_select %p67, %s66, 0
      %s69 = sadd.s32 %s33, %s29
      %p70 = scmp.lt.s32.totalorder %s69, 0
      %s71 = scalar_select %p70, %s69, 0
      %s72 = ssub.s32 %s68, %s71
      %p73 = scmp.eq.s32.totalorder %s72, 0
      %s75 = sadd.s32 %s74, 1
      %s76 = scalar_select %p73, %s74, %s75
      %p79 = pneg %p73
      %p80 = scmp.eq.s32.totalorder %s14, 1
      %p81 = por %p79, %p80
      %p82 = scmp.ne.s32.totalorder %s74, %s77
      %p83 = scmp.eq.s32.totalorder %s14, 0
      %p84 = por %p82, %p83
      %p85 = scmp.ne.s32.totalorder %s74, %s77
      %p86 = scmp.eq.s32.totalorder %s19, 1
      %p87 = por %p85, %p86
      %p88 = scmp.ne.s32.totalorder %s77, %s78
      %p89 = scmp.eq.s32.totalorder %s19, 0
      %p90 = por %p88, %p89
      %p91 = scmp.ne.s32.totalorder %s77, %s78
      %p92 = scmp.eq.s32.totalorder %s20, 1
      %p93 = por %p91, %p92
      %p95 = scmp.ne.s32.totalorder %s78, %s94
      %p96 = scmp.eq.s32.totalorder %s20, 0
      %p97 = por %p95, %p96
      %s98 = ssub.s32 %s21, %s33
      %p99 = scmp.eq.s32.totalorder %s98, 0
      %s101 = sadd.s32 %s100, 1
      %s102 = scalar_select %p99, %s100, %s101
      %p105 = pneg %p99
      %p106 = scmp.eq.s32.totalorder %s14, 1
      %p107 = por %p105, %p106
      %p108 = scmp.ne.s32.totalorder %s100, %s103
      %p109 = scmp.eq.s32.totalorder %s14, 0
      %p110 = por %p108, %p109
      %p111 = scmp.ne.s32.totalorder %s100, %s103
      %p112 = scmp.eq.s32.totalorder %s19, 1
      %p113 = por %p111, %p112
      %p114 = scmp.ne.s32.totalorder %s103, %s104
      %p115 = scmp.eq.s32.totalorder %s19, 0
      %p116 = por %p114, %p115
      %p117 = scmp.ne.s32.totalorder %s103, %s104
      %p118 = scmp.eq.s32.totalorder %s20, 1
      %p119 = por %p117, %p118
      %p121 = scmp.ne.s32.totalorder %s104, %s120
      %p122 = scmp.eq.s32.totalorder %s20, 0
      %p123 = por %p121, %p122
      %p124 = scmp.le.s32.totalorder 1, %s14
      %p125 = scmp.lt.s32.totalorder %s14, 3
      %p126 = pnand %p124, %p125
      %p127 = pneg %p126
      // Predicated region
      $region9: #{tpu_custom_call.1} parent=5 // pred_check
        _
      $region10: #{tpu_custom_call.1} parent=5 // pred_check_branch
        %129 = sbr.rel (%p126) target = $region12
      $region11: #{tpu_custom_call.1} parent=5 // pred_region
        %s130 = ssub.s32 %s14, 1
      $region12: #{tpu_custom_call.1} parent=5 // pred_fallthru
        _
      %p131 = scmp.lt.s32.totalorder %s14, 2
      // Predicated region
      $region13: #{tpu_custom_call.1} parent=5 // pred_check
        %p132 = pneg %p131
      $region14: #{tpu_custom_call.1} parent=5 // pred_check_branch
        %134 = sbr.rel (%p132) target = $region16
      $region15: #{tpu_custom_call.1} parent=5 // pred_region
        // Predicated region
        $region17: #{tpu_custom_call.1} parent=15 // pred_check
          %p135 = pneg %p52
        $region18: #{tpu_custom_call.1} parent=15 // pred_check_branch
          %137 = sbr.rel (%p135) target = $region20
        $region19: #{tpu_custom_call.1} parent=15 // pred_region
          %s138 = sand.u32 %s42, 1
          %s139 = scalar_lea.sflag [#allocation3], %s138
          %s140 = sand.u32 %s42, 1
          %s141 = smul.addr %s140, 32
          %s142 = scalar_lea.vmem [#allocation2], %s141
          %s143 = sadd.s32 %s21, %s22
          %p144 = scmp.lt.s32.totalorder %s143, 0
          %s145 = scalar_select %p144, %s143, 0
          %s146 = smul.u32 32, %s145
          %s147 = ssub.s32 1, %s146
          %s148 = smul.u32 16, %s147
          %s150 = ssub.s32 512, %s148
          %151 = vsyncadd %s139, %s150
          %p152 = scmp.ne.s32.totalorder 0, %s148
          %s153 = smul.addr %s146, 16
          %s154 = scalar_lea.hbm %s0, %s153
          %s155 = sshll.u32 %s142, 4
          %s156 = int_to_ptr.vmem [resolvable:$true] %s155
          %s157 = sshll.u32 %s147, 4
          %161 = dma.hbm_to_vmem [thread:$0]  (%p152), %s154, %s157, %s156, %s139, 16, 16, 1
        $region20: #{tpu_custom_call.1} parent=15 // pred_fallthru
          _
        // Predicated region
        $region21: #{tpu_custom_call.1} parent=15 // pred_check
          %p162 = pneg %p84
        $region22: #{tpu_custom_call.1} parent=15 // pred_check_branch
          %164 = sbr.rel (%p162) target = $region24
        $region23: #{tpu_custom_call.1} parent=15 // pred_region
          %s165 = sadd.s32 %s21, %s22
          %p166 = scmp.lt.s32.totalorder %s165, 0
          %s167 = scalar_select %p166, %s165, 0
          %s168 = smul.u32 32, %s167
          %s169 = ssub.s32 1, %s168
          %s170 = smul.u32 16, %s169
          %p171 = scmp.lt.s32.totalorder %s168, 0
          %s172 = scalar_select %p171, %s168, 0
          %s173 = scalar_lea.vmem %s1, %s172
          %s174 = sadd.s32 %s21, %s22
          %p175 = scmp.lt.s32.totalorder %s174, 0
          %s176 = scalar_select %p175, %s174, 0
          %s177 = smul.u32 32, %s176
          %s178 = ssub.s32 1, %s177
          %s179 = smul.u32 16, %s178
        $region24: #{tpu_custom_call.1} parent=15 // pred_fallthru
          _
      $region16: #{tpu_custom_call.1} parent=5 // pred_fallthru
        _
      %p180 = scmp.le.s32.totalorder 1, %s14
      %p181 = scmp.lt.s32.totalorder %s14, 3
      %p182 = pnand %p180, %p181
      %p183 = pneg %p182
      // Predicated region
      $region25: #{tpu_custom_call.1} parent=5 // pred_check
        _
      $region26: #{tpu_custom_call.1} parent=5 // pred_check_branch
        %185 = sbr.rel (%p182) target = $region28
      $region27: #{tpu_custom_call.1} parent=5 // pred_region
        %s186 = ssub.s32 %s14, 1
        %s187 = sand.u32 %s45, 1
        %s188 = scalar_lea.sflag [#allocation3], %s187
        %s189 = sand.u32 %s45, 1
        %s190 = smul.addr %s189, 32
        %s191 = scalar_lea.vmem [#allocation2], %s190
        // Predicated region
        $region29: #{tpu_custom_call.1} parent=27 // pred_check
          %p192 = pneg %p58
        $region30: #{tpu_custom_call.1} parent=27 // pred_check_branch
          %194 = sbr.rel (%p192) target = $region32
        $region31: #{tpu_custom_call.1} parent=27 // pred_region
          %195 = dma.done %s188, 512
        $region32: #{tpu_custom_call.1} parent=27 // pred_fallthru
          _
        %s196 = sand.u32 %s45, 1
        %s197 = scalar_lea.sflag [#allocation3], %s196
        %s198 = sand.u32 %s45, 1
        %s199 = smul.addr %s198, 32
        %s200 = scalar_lea.vmem [#allocation2], %s199
        %p201 = pneg %p58
        %p202 = pneg %p55
        %s203 = sadd.s32 %s23, %s24
        %p204 = scmp.lt.s32.totalorder %s203, 0
        %s205 = scalar_select %p204, %s203, 0
        %s206 = smul.u32 32, %s205
        %s207 = ssub.s32 1, %s206
        %s208 = smul.u32 16, %s207
        %p209 = scmp.lt.s32.totalorder %s206, 0
        %s210 = scalar_select %p209, %s206, 0
        %s211 = scalar_lea.vmem %s1, %s210
        %p212 = pneg %p90
        %p213 = pneg %p87
        %p214 = pneg %p116
        %p215 = pneg %p113
        %s216 = sand.u32 %s103, 1
        %s217 = scalar_lea.sflag [#allocation4], %s216
        %s218 = sand.u32 %s103, 1
        %s219 = smul.addr %s218, 16
        %s220 = scalar_lea.vmem [#allocation5], %s219
        %s221 = sadd.s32 %s23, %s24
        %p222 = scmp.lt.s32.totalorder %s221, 0
        %s223 = scalar_select %p222, %s221, 0
        %s224 = smul.u32 32, %s223
        %s225 = ssub.s32 1, %s224
        %s226 = smul.u32 16, %s225
        %s227 = sadd.s32 %s23, %s24
        %p228 = scmp.lt.s32.totalorder %s227, 0
        %s229 = scalar_select %p228, %s227, 0
        %s230 = smul.u32 32, %s229
        %s231 = ssub.s32 1, %s230
        %s232 = smul.u32 16, %s231
        %p233 = scmp.lt.s32.totalorder %s230, 0
        %s234 = scalar_select %p233, %s230, 0
        %s235 = scalar_lea.vmem %s1, %s234
        %s236 = sadd.s32 %s23, %s24
        %p237 = scmp.lt.s32.totalorder %s236, 0
        %s238 = scalar_select %p237, %s236, 0
        %s239 = smul.u32 32, %s238
        %s240 = ssub.s32 1, %s239
        %s241 = smul.u32 16, %s240
        %p242 = scmp.eq.s32.totalorder %s24, 0
        // Predicated region
        $region33: #{tpu_custom_call.1} parent=27 // pred_check
          %p243 = pneg %p242
        $region34: #{tpu_custom_call.1} parent=27 // pred_check_branch
          %245 = sbr.rel (%p243) target = $region36
        $region35: #{tpu_custom_call.1} parent=27 // pred_region
          %246 = vst [vmem:[%s220] sm:$0xff] 0.0
          %247 = vst [vmem:[%s220 + $0x8] sm:$0xff] 0.0
        $region36: #{tpu_custom_call.1} parent=27 // pred_fallthru
          _
        %v248 = vld [vmem:[%s191] sm:$0xff]
        %v249 = vld [vmem:[%s191 + $0x8] sm:$0xff]
        %v250 = vld [vmem:[%s191 + $0x10] sm:$0xff]
        %v251 = vld [vmem:[%s191 + $0x18] sm:$0xff]
        %v252 = vld [vmem:[%s235] sm:$0xff]
        %v253 = vld [vmem:[%s235 + $0x8] sm:$0xff]
        %v254 = vld [vmem:[%s235 + $0x10] sm:$0xff]
        %v255 = vld [vmem:[%s235 + $0x18] sm:$0xff]
        %v256 = vsub.f32 %v248, %v252
        %v257 = vsub.f32 %v249, %v253
        %v258 = vsub.f32 %v250, %v254
        %v259 = vsub.f32 %v251, %v255
        %v260 = vmul.f32 %v256, %v256
        %v261 = vmul.f32 %v257, %v257
        %v262 = vmul.f32 %v258, %v258
        %v263 = vmul.f32 %v259, %v259
        %v264 = vlaneseq
        %v265 = vshrl.u32 %v264, 7
        %v266 = vadd.s32 %v265, 8
        %v267 = vadd.s32 %v265, 16
        %v268 = vadd.s32 %v265, 24
        %s269 = sadd.s32 %s23, %s24
        %s270 = smul.u32 %s269, 32
        %v271 = vstv %s270
        %v272 = vadd.s32 %v271, %v265
        %v273 = vadd.s32 %v271, %v266
        %v274 = vadd.s32 %v271, %v267
        %v275 = vadd.s32 %v271, %v268
        %vm276 = vcmp.lt.s32.totalorder %v272, 1
        %vm277 = vcmp.lt.s32.totalorder %v273, 1
        %vm278 = vcmp.lt.s32.totalorder %v274, 1
        %vm279 = vcmp.lt.s32.totalorder %v275, 1
        %v280 = vsel %vm276, %v260, 0.0
        %v281 = vsel %vm277, %v261, 0.0
        %v282 = vsel %vm278, %v262, 0.0
        %v283 = vsel %vm279, %v263, 0.0
        %v284 = vadd.f32 %v280, %v281
        %v285 = vadd.f32 %v284, %v282
        %v286 = vadd.f32 %v285, %v283
        %v287 = vld [vmem:[%s220] sm:$0xff]
        %v288 = vadd.f32 %v287, %v286
        %289 = vst [vmem:[%s220] sm:$0xff] %v288
        // Predicated region
        $region37: #{tpu_custom_call.1} parent=27 // pred_check
          %p290 = pneg %p242
        $region38: #{tpu_custom_call.1} parent=27 // pred_check_branch
          %292 = sbr.rel (%p290) target = $region40
        $region39: #{tpu_custom_call.1} parent=27 // pred_region
          %v293 = vlaneseq
          %v294 = vand.u32 %v293, 127
          %vm295 = vcmp.lt.s32.totalorder %v294, 0
          %v296 = vsub.s32 0, %v294
          %v297 = vsel %vm295, %v296, %v294
          %v298 = vshrl.u32 %v297, 3
          %v299 = vand.u32 %v297, 7
          %v300 = vsub.s32 0, %v299
          %v301 = vsel %vm295, %v300, %v299
          %vm302 = vcmp.ne.s32.totalorder %v301, 0
          %vm303 = vcmp.lt.s32.totalorder %v301, 0
          %vm304 = vmand %vm303, %vm302
          %v305 = vadd.s32 %v301, 8
          %v306 = vsel %vm304, %v305, %v301
          %vm307 = vcmp.eq.s32.totalorder %v306, 7
          %v308 = vld [vmem:[%s220] sm:$0xff]
          %v309 = vsel %vm307, %v308, 0.0
          %s310 = scalar_lea.vmem %s220, 8 [#allocation5]
          %311 = vst [vmem:[%s310] sm:$0xff] %v309
        $region40: #{tpu_custom_call.1} parent=27 // pred_fallthru
          _
        %s312 = sand.u32 %s103, 1
        %s313 = scalar_lea.sflag [#allocation4], %s312
        %s314 = sand.u32 %s103, 1
        %s315 = smul.addr %s314, 16
        %s316 = scalar_lea.vmem [#allocation5], %s315
        // Predicated region
        $region41: #{tpu_custom_call.1} parent=27 // pred_check
          %p317 = pneg %p113
        $region42: #{tpu_custom_call.1} parent=27 // pred_check_branch
          %319 = sbr.rel (%p317) target = $region44
        $region43: #{tpu_custom_call.1} parent=27 // pred_region
          %s321 = ssub.s32 256, 256
          %322 = vsyncadd %s313, %s321
          %s323 = smul.addr %s23, 2
          %s324 = smul.addr %s323, 128
          %s325 = scalar_lea.hbm %s2, %s324
          %s326 = sshll.u32 %s316, 4
          %s327 = int_to_ptr.vmem [resolvable:$true] %s326
          %332 = dma.vmem_to_hbm [thread:$0]  %s327, 256, %s325, %s313, 128, 128, 8
        $region44: #{tpu_custom_call.1} parent=27 // pred_fallthru
          _
      $region28: #{tpu_custom_call.1} parent=5 // pred_fallthru
        _
      %p333 = scmp.le.s32.totalorder 2, %s14
      // Predicated region
      $region45: #{tpu_custom_call.1} parent=5 // pred_check
        %p334 = pneg %p333
      $region46: #{tpu_custom_call.1} parent=5 // pred_check_branch
        %336 = sbr.rel (%p334) target = $region48
      $region47: #{tpu_custom_call.1} parent=5 // pred_region
        %s337 = ssub.s32 %s14, 2
        // Predicated region
        $region49: #{tpu_custom_call.1} parent=47 // pred_check
          %p338 = pneg %p119
        $region50: #{tpu_custom_call.1} parent=47 // pred_check_branch
          %340 = sbr.rel (%p338) target = $region52
        $region51: #{tpu_custom_call.1} parent=47 // pred_region
          %s341 = sand.u32 %s104, 1
          %s342 = scalar_lea.sflag [#allocation4], %s341
          %s343 = sand.u32 %s104, 1
          %s344 = smul.addr %s343, 16
          %s345 = scalar_lea.vmem [#allocation5], %s344
          %346 = dma.done %s342, 256
        $region52: #{tpu_custom_call.1} parent=47 // pred_fallthru
          _
      $region48: #{tpu_custom_call.1} parent=5 // pred_fallthru
        _
    $region6: #{tpu_custom_call.1} parent=1 // loop_footer
      %s18 = sadd.s32 1, %s14
    $region7: #{tpu_custom_call.1} parent=1 // loop_footer_branch
      %13 = sbr.rel target = $region3
    $region8: #{tpu_custom_call.1} parent=1 // loop_exit
      _
    %347 = vsyncpa [#allocation3], 1
    %s348 = scalar_lea.sflag [#allocation3], 1
    %349 = vsyncpa %s348, 1
    %350 = vsyncpa [#allocation4], 1
    %s351 = scalar_lea.sflag [#allocation4], 1
    %352 = vsyncpa %s351, 1

</llo_original>
